<compile_context>
chip_gen: v7x
topology: tpu7x:2x2x1
jax: 0.10.0
libtpu: 0.0.40
codegen_flags: <defaults>
</compile_context>

<pallas_src>
import functools

import jax
import jax.numpy as jnp
from jax.experimental import pallas as pl
from jax.experimental.pallas import tpu as pltpu

_EPS = 1e-10

# ~4 MiB per input block -> 2 inputs x 2 pipeline buffers ~= 16 MiB VMEM,
# comfortably within every generation's VMEM once the scoped limit is raised.
_BLOCK_BUDGET_BYTES = 4 << 20
_VMEM_LIMIT_BYTES = 32 << 20


def _round_down(x, mult):
    return (x // mult) * mult


def _pick_row_tile(n, row_bytes):
    """Largest row-tile (multiple of 16 sublanes, works for f32 and bf16)
    whose input block fits the per-block VMEM budget; full axis if it fits."""
    if n * row_bytes <= _BLOCK_BUDGET_BYTES:
        return n
    tile = _round_down(max(16, _BLOCK_BUDGET_BYTES // row_bytes), 16)
    tile = max(16, tile)
    return min(n, tile)


def _js_rows_kernel(p_ref, q_ref, o_ref):
    """Reduce over classes (dim=1): one output element per row."""
    p = p_ref[...].astype(jnp.float32)
    q = q_ref[...].astype(jnp.float32)
    m = 0.5 * (p + q)
    log_m = jnp.log(m + _EPS)
    # kl(p,m) + kl(q,m) fused: shared log_m, no divides, single reduction.
    term = p * (jnp.log(p + _EPS) - log_m) + q * (jnp.log(q + _EPS) - log_m)
    o_ref[...] = 0.5 * jnp.sum(term, axis=1, keepdims=True)


def _js_cols_kernel(p_ref, q_ref, o_ref, *, n_rows, tile_n):
    """Reduce over the batch (dim=0): batch is the trailing 'arbitrary' grid
    axis, accumulated into the resident (1, TILE_C) output block."""
    step = pl.program_id(1)
    p = p_ref[...].astype(jnp.float32)
    q = q_ref[...].astype(jnp.float32)
    m = 0.5 * (p + q)
    log_m = jnp.log(m + _EPS)
    term = p * (jnp.log(p + _EPS) - log_m) + q * (jnp.log(q + _EPS) - log_m)

    if n_rows % tile_n != 0:
        # Mask rows past the end of the batch in the last (padded) block so
        # garbage never reaches the accumulator.
        rows = step * tile_n + jax.lax.broadcasted_iota(jnp.int32, term.shape, 0)
        term = jnp.where(rows < n_rows, term, 0.0)

    @pl.when(step == 0)
    def _():
        o_ref[...] = jnp.zeros_like(o_ref)

    o_ref[...] += 0.5 * jnp.sum(term, axis=0, keepdims=True)


def jensen_shannon(p, q, with_knowledge=False):
    """Pallas TPU implementation of Jensen_Shannon.forward(p, q, with_knowledge)."""
    assert p.shape == q.shape and p.ndim == 2
    n, c = p.shape

    # Keep bf16 inputs as bf16 through the (HBM-bound) DMA, upcast in-kernel;
    # everything else goes through f32.
    if p.dtype == jnp.bfloat16 and q.dtype == jnp.bfloat16:
        in_dtype = jnp.bfloat16
    else:
        in_dtype = jnp.float32
    p = p.astype(in_dtype)
    q = q.astype(in_dtype)
    elem_bytes = jnp.dtype(in_dtype).itemsize

    out_elems = c if with_knowledge else n
    cost = pl.CostEstimate(
        flops=10 * n * c,
        transcendentals=3 * n * c,
        bytes_accessed=2 * n * c * elem_bytes + 4 * out_elems,
    )

    if not with_knowledge:
        # Reduce over dim=1 (classes). Tile the batch axis; each row tile is
        # independent -> "parallel" grid axis.
        tile_n = _pick_row_tile(n, c * elem_bytes)
        grid = (pl.cdiv(n, tile_n),)
        out = pl.pallas_call(
            _js_rows_kernel,
            out_shape=jax.ShapeDtypeStruct((n, 1), jnp.float32),
            grid=grid,
            in_specs=[
                pl.BlockSpec((tile_n, c), lambda i: (i, 0)),
                pl.BlockSpec((tile_n, c), lambda i: (i, 0)),
            ],
            out_specs=pl.BlockSpec((tile_n, 1), lambda i: (i, 0)),
            compiler_params=pltpu.CompilerParams(
                dimension_semantics=("parallel",),
                vmem_limit_bytes=_VMEM_LIMIT_BYTES,
            ),
            cost_estimate=cost,
        )(p, q)
        return out.reshape((n,))

    # with_knowledge=True: reduce over dim=0 (batch) -> output shape (C,).
    # Classes are the leading "parallel" axis, the batch is the trailing
    # "arbitrary" reduction axis accumulated into the output block.
    tile_c = c if c <= 1024 else 1024            # multiple of 128, or full axis
    tile_n = _pick_row_tile(n, tile_c * elem_bytes)
    grid = (pl.cdiv(c, tile_c), pl.cdiv(n, tile_n))
    kernel = functools.partial(_js_cols_kernel, n_rows=n, tile_n=tile_n)
    out = pl.pallas_call(
        kernel,
        out_shape=jax.ShapeDtypeStruct((1, c), jnp.float32),
        grid=grid,
        in_specs=[
            pl.BlockSpec((tile_n, tile_c), lambda j, i: (i, j)),
            pl.BlockSpec((tile_n, tile_c), lambda j, i: (i, j)),
        ],
        out_specs=pl.BlockSpec((1, tile_c), lambda j, i: (0, j)),
        compiler_params=pltpu.CompilerParams(
            dimension_semantics=("parallel", "arbitrary"),
            vmem_limit_bytes=_VMEM_LIMIT_BYTES,
        ),
        cost_estimate=cost,
    )(p, q)
    return out.reshape((c,))


def _reference(p, q, with_knowledge=False):
    p = p.astype(jnp.float32)
    q = q.astype(jnp.float32)
    m = (p + q) / 2.0
    ax = 0 if with_knowledge else 1

    def kl(a, b):
        return jnp.sum(a * jnp.log((a + _EPS) / (b + _EPS)), axis=ax)

    return 0.5 * kl(p, m) + 0.5 * kl(q, m)


if __name__ == "__main__":
    key = jax.random.PRNGKey(0)
    k1, k2 = jax.random.split(key)

    N, C = 8, 32   # small demo shapes: 8 samples, 32 classes
    logits_p = jax.random.normal(k1, (N, C), dtype=jnp.float32)
    logits_q = jax.random.normal(k2, (N, C), dtype=jnp.float32)
    p = jax.nn.softmax(logits_p, axis=1)
    q = jax.nn.softmax(logits_q, axis=1)

    # default path: with_knowledge=False (reduce over classes) -> [N]
    js = jax.block_until_ready(jensen_shannon(p, q, with_knowledge=False))
    ref = _reference(p, q, with_knowledge=False)
    assert js.shape == (N,)
    assert jnp.allclose(js, ref, atol=1e-5, rtol=1e-5)

    # with_knowledge=True path (reduce over batch) -> [C]
    js_k = jax.block_until_ready(jensen_shannon(p, q, with_knowledge=True))
    ref_k = _reference(p, q, with_knowledge=True)
    assert js_k.shape == (C,)
    assert jnp.allclose(js_k, ref_k, atol=1e-5, rtol=1e-5)

    # second small shape with C not a multiple of 128 (full-axis block path)
    N2, C2 = 16, 48
    p2 = jax.nn.softmax(jax.random.normal(k1, (N2, C2), dtype=jnp.float32), axis=1)
    q2 = jax.nn.softmax(jax.random.normal(k2, (N2, C2), dtype=jnp.float32), axis=1)
    js2 = jax.block_until_ready(jensen_shannon(p2, q2, with_knowledge=False))
    assert jnp.allclose(js2, _reference(p2, q2, False), atol=1e-5, rtol=1e-5)
    js2k = jax.block_until_ready(jensen_shannon(p2, q2, with_knowledge=True))
    assert jnp.allclose(js2k, _reference(p2, q2, True), atol=1e-5, rtol=1e-5)

    print("KERNEL_OK")
</pallas_src>

<mosaic_0001>
module attributes {stable_mosaic.version = 11 : i64} {
  func.func @_js_rows_kernel(%arg0: i32, %arg1: memref<8x32xf32, #tpu.memory_space<vmem>>, %arg2: memref<8x32xf32, #tpu.memory_space<vmem>>, %arg3: memref<8x1xf32, #tpu.memory_space<vmem>>) attributes {dimension_semantics = [#tpu.dimension_semantics<parallel>], iteration_bounds = array<i64: 1>, scalar_prefetch = 0 : i64, scratch_operands = 0 : i64, tpu.core_type = #tpu.core_type<tc>, window_params = [{transform_indices = @transform_0, window_bounds = array<i64: 8, 32>}, {transform_indices = @transform_1, window_bounds = array<i64: 8, 32>}, {transform_indices = @transform_2, window_bounds = array<i64: 8, 1>}]} {
    %c0 = arith.constant 0 : index
    %c0_0 = arith.constant 0 : index
    %0 = vector.load %arg1[%c0, %c0_0] : memref<8x32xf32, #tpu.memory_space<vmem>>, vector<8x32xf32>
    %c0_1 = arith.constant 0 : index
    %c0_2 = arith.constant 0 : index
    %1 = vector.load %arg2[%c0_1, %c0_2] : memref<8x32xf32, #tpu.memory_space<vmem>>, vector<8x32xf32>
    %2 = arith.addf %0, %1 : vector<8x32xf32>
    %cst = arith.constant 5.000000e-01 : f32
    %3 = vector.broadcast %cst : f32 to vector<8x32xf32>
    %4 = arith.mulf %3, %2 : vector<8x32xf32>
    %cst_3 = arith.constant 1.000000e-10 : f32
    %5 = vector.broadcast %cst_3 : f32 to vector<8x32xf32>
    %6 = arith.addf %4, %5 : vector<8x32xf32>
    %7 = math.log %6 : vector<8x32xf32>
    %cst_4 = arith.constant 1.000000e-10 : f32
    %8 = vector.broadcast %cst_4 : f32 to vector<8x32xf32>
    %9 = arith.addf %0, %8 : vector<8x32xf32>
    %10 = math.log %9 : vector<8x32xf32>
    %11 = arith.subf %10, %7 : vector<8x32xf32>
    %12 = arith.mulf %0, %11 : vector<8x32xf32>
    %cst_5 = arith.constant 1.000000e-10 : f32
    %13 = vector.broadcast %cst_5 : f32 to vector<8x32xf32>
    %14 = arith.addf %1, %13 : vector<8x32xf32>
    %15 = math.log %14 : vector<8x32xf32>
    %16 = arith.subf %15, %7 : vector<8x32xf32>
    %17 = arith.mulf %1, %16 : vector<8x32xf32>
    %18 = arith.addf %12, %17 : vector<8x32xf32>
    %cst_6 = arith.constant dense<0.000000e+00> : vector<8xf32>
    %19 = vector.multi_reduction <add>, %18, %cst_6 [1] : vector<8x32xf32> to vector<8xf32>
    %20 = vector.shape_cast %19 : vector<8xf32> to vector<8x1xf32>
    %cst_7 = arith.constant 5.000000e-01 : f32
    %21 = vector.broadcast %cst_7 : f32 to vector<8x1xf32>
    %22 = arith.mulf %21, %20 : vector<8x1xf32>
    %c0_8 = arith.constant 0 : index
    %c0_9 = arith.constant 0 : index
    %23 = vector.load %arg3[%c0_8, %c0_9] : memref<8x1xf32, #tpu.memory_space<vmem>>, vector<8x1xf32>
    tpu.vector_store %arg3[%c0_8, %c0_9], %22 {strides = array<i32>} : memref<8x1xf32, #tpu.memory_space<vmem>>, vector<8x1xf32>,
    return
  }
  func.func @transform_0(%arg0: i32) -> (i32, i32) {
    %c0_i32 = arith.constant 0 : i32
    %c0_i32_0 = arith.constant 0 : i32
    return %arg0, %c0_i32 : i32, i32
  }
  func.func @transform_1(%arg0: i32) -> (i32, i32) {
    %c0_i32 = arith.constant 0 : i32
    %c0_i32_0 = arith.constant 0 : i32
    return %arg0, %c0_i32 : i32, i32
  }
  func.func @transform_2(%arg0: i32) -> (i32, i32) {
    %c0_i32 = arith.constant 0 : i32
    %c0_i32_0 = arith.constant 0 : i32
    return %arg0, %c0_i32 : i32, i32
  }
}

</mosaic_0001>

<llo_original>
// kernel: tpu_custom_call.1
$region0: #{tpu_custom_call.1}
  #allocation0 [shape = 'u32[]', space=smem, size = 0x4, offset = 0x4, fixed_abs, tag = 'smem constant byte address 0x4 - core index']
  #allocation1 [shape = 'u32[144,128]{1,0:T(1,128)}', space=vmem, size = 0x12000, scoped, tag = 'internal scratch']
  %s0 = inlined_call_operand.hbm [shape: f32[8,32], index: 0, kind: input, shape index: {}]
  %s1 = inlined_call_operand.hbm [shape: f32[8,32], index: 1, kind: input, shape index: {}]
  %s2 = inlined_call_operand.vmem [shape: f32[8,1], index: 2, kind: output, shape index: {}]
  %s3 = sld [smem:[#allocation0]]
  $region26: #{tpu_custom_call.1} parent=0
    _
  %s5 = ssub.s32 1, %s3
  %s6 = scalar_select 0, %s5, %s3
  $region1: #{tpu_custom_call.1} parent=0
    #allocation2 [shape = 'u8[4096]{0}', space=vmem, size = 0x1000, scoped, tag = 'input window, operand 0, single buffered']
    #allocation3 [shape = 's32[1]{0}', space=sflag, size = 0x4, scoped, tag = 'scoped memory for tpu_custom_call.1']
    #allocation4 [shape = 'u8[4096]{0}', space=vmem, size = 0x1000, scoped, tag = 'input window, operand 1, single buffered']
    #allocation5 [shape = 's32[1]{0}', space=sflag, size = 0x4, scoped, tag = 'scoped memory for tpu_custom_call.1']
    %7 = vsyncpa [#allocation3], 0
    %8 = vsyncpa [#allocation5], 0
    // Predicated region
    $region2: #{tpu_custom_call.1} parent=1 // pred_check
      _
    $region3: #{tpu_custom_call.1} parent=1 // pred_check_branch
      %10 = sbr.rel (0) target = $region5
    $region4: #{tpu_custom_call.1} parent=1 // pred_region
      %s12 = ssub.s32 128, 128
      %13 = vsyncadd [#allocation3], %s12
      %s15 = sshll.u32 [#allocation2], 4
      %s16 = int_to_ptr.vmem [resolvable:$true] %s15
      %18 = dma.hbm_to_vmem [thread:$0]  %s0, 128, %s16, [#allocation3]
    $region5: #{tpu_custom_call.1} parent=1 // pred_fallthru
      _
    // Predicated region
    $region6: #{tpu_custom_call.1} parent=1 // pred_check
      _
    $region7: #{tpu_custom_call.1} parent=1 // pred_check_branch
      %20 = sbr.rel (0) target = $region9
    $region8: #{tpu_custom_call.1} parent=1 // pred_region
      %s22 = ssub.s32 128, 128
      %23 = vsyncadd [#allocation5], %s22
      %s25 = sshll.u32 [#allocation4], 4
      %s26 = int_to_ptr.vmem [resolvable:$true] %s25
      %28 = dma.hbm_to_vmem [thread:$0]  %s1, 128, %s26, [#allocation5]
    $region9: #{tpu_custom_call.1} parent=1 // pred_fallthru
      _
    // Predicated region
    $region10: #{tpu_custom_call.1} parent=1 // pred_check
      _
    $region11: #{tpu_custom_call.1} parent=1 // pred_check_branch
      %30 = sbr.rel (0) target = $region13
    $region12: #{tpu_custom_call.1} parent=1 // pred_region
      %31 = dma.done [#allocation3], 128
    $region13: #{tpu_custom_call.1} parent=1 // pred_fallthru
      _
    // Predicated region
    $region14: #{tpu_custom_call.1} parent=1 // pred_check
      _
    $region15: #{tpu_custom_call.1} parent=1 // pred_check_branch
      %33 = sbr.rel (0) target = $region17
    $region16: #{tpu_custom_call.1} parent=1 // pred_region
      %34 = dma.done [#allocation5], 128
    $region17: #{tpu_custom_call.1} parent=1 // pred_fallthru
      _
    %v35 = vld [vmem:[#allocation2] sm:$0xff]
    %v36 = vld [vmem:[#allocation4] sm:$0xff]
    %v37 = vadd.f32 %v35, %v36
    %v38 = vmul.f32 %v37, 0.5
    %v39 = vadd.f32 %v38, 1e-10
    %v40 = vlog2.pop %v39
    %v41 = vmul.f32 %v40, 0.6931472
    %v42 = vadd.f32 %v35, 1e-10
    %v43 = vlog2.pop %v42
    %v44 = vmul.f32 %v43, 0.6931472
    %v45 = vsub.f32 %v44, %v41
    %v46 = vmul.f32 %v35, %v45
    %v47 = vadd.f32 %v36, 1e-10
    %v48 = vlog2.pop %v47
    %v49 = vmul.f32 %v48, 0.6931472
    %v50 = vsub.f32 %v49, %v41
    %v51 = vmul.f32 %v36, %v50
    %v52 = vadd.f32 %v46, %v51
    %vm53 = vcmask 261120
    %v54 = vsel %vm53, %v52, 0.0
    %55 = vadd.xlane.f32.xlu0 %v54
    %v56 = vpop.xlane.xlu0 %55
    %v57 = vmul.f32 %v56, 0.5
    %vm58 = vcmask 7168
    %59 = vst.msk [vmem:[%s2] sm:$0xff] %vm58, %v57
    // Predicated region
    $region18: #{tpu_custom_call.1} parent=1 // pred_check
      _
    $region19: #{tpu_custom_call.1} parent=1 // pred_check_branch
      %61 = sbr.rel (0) target = $region21
    $region20: #{tpu_custom_call.1} parent=1 // pred_region
      _
    $region21: #{tpu_custom_call.1} parent=1 // pred_fallthru
      _
    // Predicated region
    $region22: #{tpu_custom_call.1} parent=1 // pred_check
      _
    $region23: #{tpu_custom_call.1} parent=1 // pred_check_branch
      %63 = sbr.rel (0) target = $region25
    $region24: #{tpu_custom_call.1} parent=1 // pred_region
      _
    $region25: #{tpu_custom_call.1} parent=1 // pred_fallthru
      _
    %64 = vsyncpa [#allocation3], 1
    %65 = vsyncpa [#allocation5], 1

</llo_original>
